<compile_context>
chip_gen: v5e
topology: v5e:2x2
jax: 0.10.0
libtpu: 0.0.40
codegen_flags: <defaults>
</compile_context>

<pallas_src>
import functools

import jax
import jax.numpy as jnp
from jax.experimental import pallas as pl
from jax.experimental.pallas import tpu as pltpu

_LANE = 128


def _round_up(x: int, m: int) -> int:
    return ((x + m - 1) // m) * m


def _cdiv(a: int, b: int) -> int:
    return (a + b - 1) // b


def _vmem_ceiling_bytes() -> int:
    """Generation-aware usable-VMEM ceiling (leave ~1/8 for Mosaic internals)."""
    try:
        cap = int(pltpu.get_tpu_info().vmem_capacity_bytes)
    except Exception:
        cap = 64 << 20  # conservative fallback: v7x per-TC VMEM
    return (cap // 8) * 7


# ---------------------------------------------------------------------------
# One-time parameter prep (hoisted out of the per-step forward path).
# ---------------------------------------------------------------------------
def prepare_linear_params(weight, bias, compute_dtype=jnp.float32):
    """weight: (C, F) PyTorch nn.Linear layout; bias: (C,).

    Returns (w_t, b_p) with w_t = weight.T padded on the class dim to a lane
    multiple (F, Cp) and b_p = bias padded to (1, Cp) in f32.  Do this once at
    model init and reuse across forward() calls.
    """
    C, F = weight.shape
    Cp = _round_up(max(C, _LANE), _LANE)
    w_t = jnp.pad(weight.T.astype(compute_dtype), ((0, 0), (0, Cp - C)))
    b_p = jnp.pad(bias.astype(jnp.float32).reshape(1, C), ((0, 0), (0, Cp - C)))
    return w_t, b_p


# ---------------------------------------------------------------------------
# Kernels
# ---------------------------------------------------------------------------
def _linear_kernel(x_ref, wt_ref, b_ref, o_ref, *, n_valid):
    # x_ref: (tm, F), wt_ref: (F, Cp), b_ref: (1, Cp), o_ref: (tm, C)
    logits = jnp.dot(x_ref[...], wt_ref[...], preferred_element_type=jnp.float32)
    logits = logits + b_ref[...]
    o_ref[...] = logits[:, :n_valid].astype(o_ref.dtype)


def _linear_kernel_ktiled(x_ref, wt_ref, b_ref, o_ref, acc_ref, *,
                          n_valid, n_features, tk, mask_tail):
    # grid = (n_m, n_k); reduction axis k is last ("arbitrary").
    k = pl.program_id(1)

    @pl.when(k == 0)
    def _init():
        acc_ref[...] = jnp.zeros_like(acc_ref)

    x = x_ref[...]
    w = wt_ref[...]
    if mask_tail:
        # Last K block reads past F: zero both operands' tail so stale VMEM
        # contents never reach the accumulator.
        base = k * tk
        col = base + jax.lax.broadcasted_iota(jnp.int32, x.shape, 1)
        x = jnp.where(col < n_features, x, jnp.zeros_like(x))
        row = base + jax.lax.broadcasted_iota(jnp.int32, w.shape, 0)
        w = jnp.where(row < n_features, w, jnp.zeros_like(w))

    acc_ref[...] += jnp.dot(x, w, preferred_element_type=jnp.float32)

    @pl.when(k == pl.num_programs(1) - 1)
    def _store():
        logits = acc_ref[...] + b_ref[...]
        o_ref[...] = logits[:, :n_valid].astype(o_ref.dtype)


# ---------------------------------------------------------------------------
# Forward
# ---------------------------------------------------------------------------
def linear_forward(x, w_t, b_p, n_classes, *, tm_max=2048, tk_hint=None):
    """Logits = x @ weight.T + bias, using prepared (w_t, b_p).

    x: (B, F); w_t: (F, Cp) lane-padded transposed weight; b_p: (1, Cp) f32.
    Returns (B, n_classes) in x.dtype.
    """
    B, F = x.shape
    Fw, Cp = w_t.shape
    assert Fw == F, "prepared weight feature dim must match x"
    C = int(n_classes)
    out_dtype = x.dtype

    xelt = jnp.dtype(x.dtype).itemsize
    welt = jnp.dtype(w_t.dtype).itemsize
    oelt = xelt
    sublane = 8 * max(1, 4 // xelt)  # 8 (f32), 16 (bf16), 32 (int8)

    vmem_ceiling = _vmem_ceiling_bytes()
    budget = (vmem_ceiling * 3) // 4

    # ---- K (feature) tiling decision -------------------------------------
    if tk_hint is not None:
        tk = _round_up(tk_hint, _LANE)
    elif F * Cp * welt > budget // 3:
        # Weight slab too big to keep resident (matters first on v7x's 64 MiB):
        # stream it in ~2 MiB blocks along the feature axis.
        tk = max(_LANE, ((2 << 20) // (Cp * welt)) // _LANE * _LANE)
    else:
        tk = _round_up(F, _LANE)
    tk = min(tk, _round_up(F, _LANE))
    n_k = _cdiv(F, tk)
    k_tiled = n_k > 1

    # ---- batch tile --------------------------------------------------------
    if k_tiled:
        resident = 2 * tk * Cp * welt + Cp * 4                 # streamed W (2 bufs) + bias
        per_row = 2 * tk * xelt + 2 * C * oelt + Cp * 4        # x(dbl) + out(dbl) + f32 acc
    else:
        resident = F * Cp * welt + Cp * 4                      # single-buffered W + bias
        per_row = 2 * F * xelt + 2 * C * oelt                  # x(dbl) + out(dbl)
    avail = max(budget - resident, sublane * per_row)
    tm = max(sublane, min(tm_max, (avail // per_row) // sublane * sublane))
    tm = min(tm, _round_up(B, sublane))
    # v7x megacore: keep >= 2 batch tiles so the "parallel" axis shards across
    # both TensorCores (neutral on single-core v5e/v6e).
    if B > 2 * sublane and _cdiv(B, tm) < 2:
        tm = _round_up(_cdiv(B, 2), sublane)
    n_m = _cdiv(B, tm)

    # ---- specs / call -------------------------------------------------------
    if not k_tiled:
        kernel = functools.partial(_linear_kernel, n_valid=C)
        grid = (n_m,)
        in_specs = [
            pl.BlockSpec((tm, F), lambda i: (i, 0)),                       # streamed x tiles
            pl.BlockSpec((F, Cp), lambda i: (0, 0),
                         pipeline_mode=pl.Buffered(1)),                    # resident weight
            pl.BlockSpec((1, Cp), lambda i: (0, 0),
                         pipeline_mode=pl.Buffered(1)),                    # resident bias
        ]
        out_specs = pl.BlockSpec((tm, C), lambda i: (i, 0))                # unpadded output
        scratch = []
        semantics = ("parallel",)
        needed = 2 * tm * F * xelt + 2 * tm * C * oelt + F * Cp * welt + Cp * 4
    else:
        kernel = functools.partial(_linear_kernel_ktiled, n_valid=C,
                                   n_features=F, tk=tk, mask_tail=(F % tk != 0))
        grid = (n_m, n_k)
        in_specs = [
            pl.BlockSpec((tm, tk), lambda i, k: (i, k)),                   # x tiles (M, K)
            pl.BlockSpec((tk, Cp), lambda i, k: (k, 0)),                   # streamed weight
            pl.BlockSpec((1, Cp), lambda i, k: (0, 0),
                         pipeline_mode=pl.Buffered(1)),                    # resident bias
        ]
        out_specs = pl.BlockSpec((tm, C), lambda i, k: (i, 0))             # resident over k
        scratch = [pltpu.VMEM((tm, Cp), jnp.float32)]                      # f32 accumulator
        semantics = ("parallel", "arbitrary")
        needed = (2 * tm * tk * xelt + 2 * tm * C * oelt
                  + 2 * tk * Cp * welt + Cp * 4 + tm * Cp * 4)

    vmem_limit = int(min(max(needed + (needed >> 2) + (2 << 20), 32 << 20),
                         vmem_ceiling))

    return pl.pallas_call(
        kernel,
        out_shape=jax.ShapeDtypeStruct((B, C), out_dtype),
        grid_spec=pltpu.PrefetchScalarGridSpec(
            num_scalar_prefetch=0,
            grid=grid,
            in_specs=in_specs,
            out_specs=out_specs,
            scratch_shapes=scratch,
        ),
        compiler_params=pltpu.CompilerParams(
            dimension_semantics=semantics,
            vmem_limit_bytes=vmem_limit,
        ),
    )(x, w_t, b_p)


def logistic_regression_forward(x, weight, bias, **kwargs):
    """Convenience wrapper: prepares params then runs the kernel.

    NOTE: for a serving/training loop, call prepare_linear_params() once at
    model init and reuse (w_t, b_p) with linear_forward() — the transpose/pad
    is hoisted out of the per-step path.
    """
    w_t, b_p = prepare_linear_params(weight, bias, compute_dtype=x.dtype)
    return linear_forward(x, w_t, b_p, weight.shape[0], **kwargs)


if __name__ == "__main__":
    key = jax.random.PRNGKey(0)
    kx, kw, kb, kx2, kx3, kw3, kb3 = jax.random.split(key, 7)

    # Shapes consistent with the module: x is (batch, n_features), Linear(F, C).
    batch, n_features, n_classes = 8, 32, 10
    bound = 1.0 / (n_features ** 0.5)

    x = jax.random.normal(kx, (batch, n_features), dtype=jnp.float32)
    weight = jax.random.uniform(
        kw, (n_classes, n_features), minval=-bound, maxval=bound, dtype=jnp.float32)
    bias = jax.random.uniform(
        kb, (n_classes,), minval=-bound, maxval=bound, dtype=jnp.float32)

    # Hoisted one-time param prep, reused across forward calls.
    w_t, b_p = prepare_linear_params(weight, bias)

    # 1) basic forward
    out = jax.block_until_ready(linear_forward(x, w_t, b_p, n_classes))
    ref = x @ weight.T + bias
    assert out.shape == (batch, n_classes)
    assert jnp.allclose(out, ref, atol=1e-5, rtol=1e-5)

    # 2) non-multiple batch + forced multi-tile grid: exercises the partial
    #    last batch block (masked OOB stores) and the tiled DMA pipeline,
    #    with no wrapper-side padding of x.
    x2 = jax.random.normal(kx2, (20, n_features), dtype=jnp.float32)
    out2 = jax.block_until_ready(linear_forward(x2, w_t, b_p, n_classes, tm_max=8))
    ref2 = x2 @ weight.T + bias
    assert out2.shape == (20, n_classes)
    assert jnp.allclose(out2, ref2, atol=1e-5, rtol=1e-5)

    # 3) feature (K) tiling path (v7x large-F fallback), forced via tk_hint,
    #    with F not a multiple of tk to exercise the in-kernel tail mask and
    #    the f32 accumulator init/finalize.
    f3, c3, b3 = 192, 10, 24
    bound3 = 1.0 / (f3 ** 0.5)
    x3 = jax.random.normal(kx3, (b3, f3), dtype=jnp.float32)
    w3 = jax.random.uniform(kw3, (c3, f3), minval=-bound3, maxval=bound3,
                            dtype=jnp.float32)
    b3v = jax.random.uniform(kb3, (c3,), minval=-bound3, maxval=bound3,
                             dtype=jnp.float32)
    out3 = jax.block_until_ready(
        logistic_regression_forward(x3, w3, b3v, tk_hint=128))
    ref3 = x3 @ w3.T + b3v
    assert out3.shape == (b3, c3)
    assert jnp.allclose(out3, ref3, atol=1e-4, rtol=1e-4)

    print("KERNEL_OK")
</pallas_src>

<mosaic_0001>
module attributes {stable_mosaic.version = 11 : i64} {
  func.func @_linear_kernel(%arg0: i32, %arg1: memref<8x32xf32, #tpu.memory_space<vmem>>, %arg2: memref<32x128xf32, #tpu.memory_space<vmem>>, %arg3: memref<1x128xf32, #tpu.memory_space<vmem>>, %arg4: memref<8x10xf32, #tpu.memory_space<vmem>>) attributes {dimension_semantics = [#tpu.dimension_semantics<parallel>], iteration_bounds = array<i64: 1>, scalar_prefetch = 0 : i64, scratch_operands = 0 : i64, tpu.core_type = #tpu.core_type<tc>, window_params = [{transform_indices = @transform_0, window_bounds = array<i64: 8, 32>}, {pipeline_mode = #tpu.pipeline_mode<synchronous>, transform_indices = @transform_1, window_bounds = array<i64: 32, 128>}, {pipeline_mode = #tpu.pipeline_mode<synchronous>, transform_indices = @transform_2, window_bounds = array<i64: 1, 128>}, {transform_indices = @transform_3, window_bounds = array<i64: 8, 10>}]} {
    %c0 = arith.constant 0 : index
    %c0_0 = arith.constant 0 : index
    %0 = vector.load %arg1[%c0, %c0_0] : memref<8x32xf32, #tpu.memory_space<vmem>>, vector<8x32xf32>
    %c0_1 = arith.constant 0 : index
    %c0_2 = arith.constant 0 : index
    %1 = vector.load %arg2[%c0_1, %c0_2] : memref<32x128xf32, #tpu.memory_space<vmem>>, vector<32x128xf32>
    %cst = arith.constant dense<0.000000e+00> : vector<8x128xf32>
    %2 = tpu.matmul %0, %1, %cst {dimension_numbers = #tpu.dot_dimension_numbers<[1], [0], [0], [1], [0, 0, 1, 1], [], []>} : vector<8x32xf32>, vector<32x128xf32>, vector<8x128xf32> -> vector<8x128xf32>
    %c0_3 = arith.constant 0 : index
    %c0_4 = arith.constant 0 : index
    %3 = vector.load %arg3[%c0_3, %c0_4] : memref<1x128xf32, #tpu.memory_space<vmem>>, vector<1x128xf32>
    %4 = vector.broadcast %3 : vector<1x128xf32> to vector<8x128xf32>
    %5 = arith.addf %2, %4 : vector<8x128xf32>
    %6 = vector.extract_strided_slice %5 {offsets = [0, 0], sizes = [8, 10], strides = [1, 1]} : vector<8x128xf32> to vector<8x10xf32>
    %c0_5 = arith.constant 0 : index
    %c0_6 = arith.constant 0 : index
    %7 = vector.load %arg4[%c0_5, %c0_6] : memref<8x10xf32, #tpu.memory_space<vmem>>, vector<8x10xf32>
    tpu.vector_store %arg4[%c0_5, %c0_6], %6 {strides = array<i32>} : memref<8x10xf32, #tpu.memory_space<vmem>>, vector<8x10xf32>,
    return
  }
  func.func @transform_0(%arg0: i32) -> (i32, i32) {
    %c0_i32 = arith.constant 0 : i32
    %c0_i32_0 = arith.constant 0 : i32
    return %arg0, %c0_i32 : i32, i32
  }
  func.func @transform_1(%arg0: i32) -> (i32, i32) {
    %c0_i32 = arith.constant 0 : i32
    %c0_i32_0 = arith.constant 0 : i32
    %c0_i32_1 = arith.constant 0 : i32
    return %c0_i32, %c0_i32_0 : i32, i32
  }
  func.func @transform_2(%arg0: i32) -> (i32, i32) {
    %c0_i32 = arith.constant 0 : i32
    %c0_i32_0 = arith.constant 0 : i32
    %c0_i32_1 = arith.constant 0 : i32
    return %c0_i32, %c0_i32_0 : i32, i32
  }
  func.func @transform_3(%arg0: i32) -> (i32, i32) {
    %c0_i32 = arith.constant 0 : i32
    %c0_i32_0 = arith.constant 0 : i32
    return %arg0, %c0_i32 : i32, i32
  }
}

</mosaic_0001>

<llo_original>
// kernel: tpu_custom_call.1
$region0: #{tpu_custom_call.1}
  #allocation0 [shape = 'u32[]', space=smem, size = 0x4, offset = 0x4, fixed_abs, tag = 'smem constant byte address 0x4 - core index']
  #allocation1 [shape = 'u32[72,128]{1,0:T(1,128)}', space=vmem, size = 0x9000, scoped, tag = 'internal scratch']
  %s0 = inlined_call_operand.hbm [shape: f32[8,32], index: 0, kind: input, shape index: {}]
  %s1 = inlined_call_operand.hbm [shape: f32[32,128], index: 1, kind: input, shape index: {}]
  %s2 = inlined_call_operand.vmem [shape: f32[1,128], index: 2, kind: input, shape index: {}]
  %s3 = inlined_call_operand.hbm [shape: f32[8,10], index: 3, kind: output, shape index: {}]
  %s4 = sld [smem:[#allocation0]]
  $region30: #{tpu_custom_call.1} parent=0
    _
  %s6 = ssub.s32 1, %s4
  %s7 = scalar_select 0, %s6, %s4
  $region1: #{tpu_custom_call.1} parent=0
    #allocation2 [shape = 'u8[4096]{0}', space=vmem, size = 0x1000, scoped, tag = 'input window, operand 0, single buffered']
    #allocation3 [shape = 's32[1]{0}', space=sflag, size = 0x4, scoped, tag = 'scoped memory for tpu_custom_call.1']
    #allocation4 [shape = 's32[1]{0}', space=sflag, size = 0x4, scoped, tag = 'scoped memory for tpu_custom_call.1']
    #allocation5 [shape = 'u8[16384]{0}', space=vmem, size = 0x4000, scoped, tag = 'input window, operand 1, single buffered']
    #allocation6 [shape = 's32[1]{0}', space=sflag, size = 0x4, scoped, tag = 'scoped memory for tpu_custom_call.1']
    #allocation7 [shape = 'u8[4096]{0}', space=vmem, size = 0x1000, scoped, tag = 'output window, operand 0, single buffered']
    %8 = vsyncpa [#allocation3], 0
    %9 = vsyncpa [#allocation6], 0
    %10 = vsyncpa [#allocation4], 0
    // Predicated region
    $region2: #{tpu_custom_call.1} parent=1 // pred_check
      _
    $region3: #{tpu_custom_call.1} parent=1 // pred_check_branch
      %12 = sbr.rel (0) target = $region5
    $region4: #{tpu_custom_call.1} parent=1 // pred_region
      %14 = vsyncadd [#allocation3], 0
      %s16 = sshll.u32 %s0, 4
      %s17 = int_to_ptr.hbm [resolvable:$true] %s16
      %s18 = sshll.u32 [#allocation2], 4
      %s19 = int_to_ptr.vmem [resolvable:$true] %s18
      %21 = dma.hbm_to_vmem [thread:$0]  %s17, 128, %s19, [#allocation3]
    $region5: #{tpu_custom_call.1} parent=1 // pred_fallthru
      _
    // Predicated region
    $region6: #{tpu_custom_call.1} parent=1 // pred_check
      _
    $region7: #{tpu_custom_call.1} parent=1 // pred_check_branch
      %23 = sbr.rel (0) target = $region9
    $region8: #{tpu_custom_call.1} parent=1 // pred_region
      %25 = vsyncadd [#allocation6], 0
      %s26 = sshll.u32 %s1, 4
      %s27 = int_to_ptr.hbm [resolvable:$true] %s26
      %s28 = sshll.u32 [#allocation5], 4
      %s29 = int_to_ptr.vmem [resolvable:$true] %s28
      %34 = dma.hbm_to_vmem [thread:$0]  %s27, 512, %s29, [#allocation6], 128, 128, 8
    $region9: #{tpu_custom_call.1} parent=1 // pred_fallthru
      _
    // Predicated region
    $region10: #{tpu_custom_call.1} parent=1 // pred_check
      _
    $region11: #{tpu_custom_call.1} parent=1 // pred_check_branch
      %36 = sbr.rel (0) target = $region13
    $region12: #{tpu_custom_call.1} parent=1 // pred_region
      _
    $region13: #{tpu_custom_call.1} parent=1 // pred_fallthru
      _
    // Predicated region
    $region14: #{tpu_custom_call.1} parent=1 // pred_check
      _
    $region15: #{tpu_custom_call.1} parent=1 // pred_check_branch
      %38 = sbr.rel (0) target = $region17
    $region16: #{tpu_custom_call.1} parent=1 // pred_region
      %40 = dma.done [#allocation3], 128
    $region17: #{tpu_custom_call.1} parent=1 // pred_fallthru
      _
    // Predicated region
    $region18: #{tpu_custom_call.1} parent=1 // pred_check
      _
    $region19: #{tpu_custom_call.1} parent=1 // pred_check_branch
      %42 = sbr.rel (0) target = $region21
    $region20: #{tpu_custom_call.1} parent=1 // pred_region
      %44 = dma.done [#allocation6], 512
    $region21: #{tpu_custom_call.1} parent=1 // pred_fallthru
      _
    %v45 = vld [vmem:[#allocation2] sm:$0xff]
    %v46 = vld [vmem:[#allocation5] sm:$0xff]
    %v47 = vld [vmem:[#allocation5 + $0x8] sm:$0xff]
    %v48 = vld [vmem:[#allocation5 + $0x10] sm:$0xff]
    %v49 = vld [vmem:[#allocation5 + $0x18] sm:$0xff]
    %v50 = vld [vmem:[%s2] sm:$0x1]
    %v52 = vperm.slane %v50, 0
    %vm54 = vcmask 261120
    %v56 = vsel %vm54, %v45, 0
    %58 = vmatpush.msra.mxu0 0.0
    %59 = vmatpush.msra.mxu0 0.0
    %60 = vmatpush.msra.mxu0 0.0
    %61 = vmatpush.msra.mxu0 0.0
    %62 = vmatpush.msra.mxu0 0.0
    %63 = vmatpush.msra.mxu0 0.0
    %64 = vmatpush.msra.mxu0 0.0
    %65 = vmatpush.msra.mxu0 0.0
    %66 = vmatpush.msra.mxu0 0.0
    %67 = vmatpush.msra.mxu0 0.0
    %68 = vmatpush.msra.mxu0 0.0
    %69 = vmatpush.msra.mxu0 0.0
    %70 = vmatpush.msra.mxu0 %v49
    %71 = vmatpush.msra.mxu0 %v48
    %72 = vmatpush.msra.mxu0 %v47
    %73 = vmatpush.msra.mxu0 %v46
    %74 = vmatmul.f32.gmra.mxu0 %v56
    %v75 = vpop.f32.mrf.mxu0
    %v76 = vadd.f32 %v52, %v75
    %77 = vdwg.mxu0
    %vm78 = vcmask 80896
    %79 = vst.msk [vmem:[#allocation7] sm:$0xff] %vm78, %v76
    // Predicated region
    $region22: #{tpu_custom_call.1} parent=1 // pred_check
      _
    $region23: #{tpu_custom_call.1} parent=1 // pred_check_branch
      %81 = sbr.rel (0) target = $region25
    $region24: #{tpu_custom_call.1} parent=1 // pred_region
      %83 = vsyncadd [#allocation4], 0
      %s85 = sshll.u32 [#allocation7], 4
      %s86 = int_to_ptr.vmem [resolvable:$true] %s85
      %s87 = sshll.u32 %s3, 4
      %s88 = int_to_ptr.hbm [resolvable:$true] %s87
      %90 = dma.vmem_to_hbm [thread:$0]  %s86, 128, %s88, [#allocation4]
    $region25: #{tpu_custom_call.1} parent=1 // pred_fallthru
      _
    // Predicated region
    $region26: #{tpu_custom_call.1} parent=1 // pred_check
      _
    $region27: #{tpu_custom_call.1} parent=1 // pred_check_branch
      %92 = sbr.rel (0) target = $region29
    $region28: #{tpu_custom_call.1} parent=1 // pred_region
      %94 = dma.done [#allocation4], 128
    $region29: #{tpu_custom_call.1} parent=1 // pred_fallthru
      _
    %95 = vsyncpa [#allocation3], 1
    %96 = vsyncpa [#allocation6], 1
    %97 = vsyncpa [#allocation4], 1

</llo_original>
